<compile_context>
chip_gen: v7x
topology: tpu7x:2x2x1
jax: 0.10.0
libtpu: 0.0.40
codegen_flags: <defaults>
</compile_context>

<pallas_src>
import jax
import jax.numpy as jnp
from jax.experimental import pallas as pl
from jax.experimental.pallas import tpu as pltpu

_EPS = 1e-8  # torch.nn.functional.cosine_similarity default eps


def _round_up(x, m):
    return ((x + m - 1) // m) * m


def _vmem_budget():
    """Per-generation scoped-VMEM limit and per-array block byte budget."""
    cap = None
    try:
        info_fn = getattr(pltpu, "get_tpu_info", None)
        if info_fn is not None:
            cap = getattr(info_fn(), "vmem_capacity_bytes", None)
    except Exception:
        cap = None
    if not cap:
        cap = 64 * 1024 * 1024  # conservative fallback (v7x per-TC VMEM)
    limit = (int(cap) * 3) // 4          # leave headroom for Mosaic scratch
    block = limit // 8                   # 4 live arrays x 2 pipeline buffers
    return int(limit), int(block)


def _csafm_kernel(x_ref, y_ref, wx_ref, wy_ref):
    # x_ref / y_ref: (TR, HW) tiles; each row is one (b, c) channel map.
    xf = x_ref[...].astype(jnp.float32)
    yf = y_ref[...].astype(jnp.float32)

    # Reductions over the spatial (lane) axis, accumulated in f32.
    dot = jnp.sum(xf * yf, axis=-1, keepdims=True)   # (TR, 1)
    sxx = jnp.sum(xf * xf, axis=-1, keepdims=True)   # (TR, 1)
    syy = jnp.sum(yf * yf, axis=-1, keepdims=True)   # (TR, 1)

    # cos = dot / max(||x||*||y||, eps) == dot * rsqrt(max(sxx*syy, eps^2))
    # (single EUP rsqrt instead of two sqrts + a divide).
    inv = jax.lax.rsqrt(jnp.maximum(sxx * syy, jnp.float32(_EPS * _EPS)))
    w = jnp.maximum(dot * inv, 0.0)                  # relu(cos), (TR, 1)

    # w*x + x = (1+w)*x ; (1-w)*y + y = (2-w)*y.  Multiply in f32 (no native
    # bf16 VALU on v5e; matches PyTorch precision), cast only at the store.
    wx_ref[...] = (xf * (1.0 + w)).astype(wx_ref.dtype)
    wy_ref[...] = (yf * (2.0 - w)).astype(wy_ref.dtype)


def csafm_forward(Fx, Fy, *, row_tile=None, vmem_limit_bytes=None,
                  block_bytes_per_array=None):
    """Fx, Fy: (B, C, H, W) arrays. Returns (w_x, w_y), each (B, C, H, W)."""
    assert Fx.shape == Fy.shape
    B, C, H, W = Fx.shape
    HW = H * W
    rows = B * C
    dtype = Fx.dtype
    itemsize = jnp.dtype(dtype).itemsize
    sub = {4: 8, 2: 16, 1: 32}.get(itemsize, 8)      # min sublane multiple

    # Lane padding ONLY for the degenerate HW < 128 case (avoids fully-masked
    # stores); for HW >= 128 the block lane dim equals the full array dim, so
    # no host-side pad/slice HBM traffic at all.
    lane_pad = HW < 128
    HW_blk = 128 if lane_pad else HW

    x = Fx.reshape(rows, HW)
    y = Fy.reshape(rows, HW)
    if lane_pad:
        x = jnp.pad(x, ((0, 0), (0, HW_blk - HW)))
        y = jnp.pad(y, ((0, 0), (0, HW_blk - HW)))

    # Per-generation VMEM sizing (v5e/v6e ~96 MiB limit / 12 MiB blocks,
    # v7x ~48 MiB limit / 6 MiB blocks).
    if vmem_limit_bytes is None or block_bytes_per_array is None:
        auto_limit, auto_block = _vmem_budget()
        if vmem_limit_bytes is None:
            vmem_limit_bytes = auto_limit
        if block_bytes_per_array is None:
            block_bytes_per_array = auto_block

    # Row tile from the VMEM budget (no artificial cap).
    hw_phys = _round_up(HW_blk, 128)                 # physical lane width
    if row_tile is None:
        tr = block_bytes_per_array // (hw_phys * itemsize)
        tr = max(sub, (tr // sub) * sub)
    else:
        tr = max(sub, _round_up(int(row_tile), sub))

    if rows > sub:
        # Keep grid >= 2 so both v7x TensorCores (and megacore split) get work.
        half = _round_up(-(-rows // 2), sub)
        tr = min(tr, half)
    else:
        # Tiny row count: block second-minor dim == full array dim (allowed).
        tr = min(tr, max(rows, 1))
    # TODO(synk): for huge H*W where even the minimum row tile overflows the
    # VMEM budget, add a second "arbitrary" grid axis over HW with a two-pass
    # accumulate-then-scale scheme instead of one-shot full-HW row blocks.

    grid = (pl.cdiv(rows, tr),)
    blk = pl.BlockSpec((tr, HW_blk), lambda i: (i, 0))

    cost = pl.CostEstimate(
        flops=8 * rows * HW_blk,
        transcendentals=rows,
        bytes_accessed=4 * rows * HW_blk * itemsize,
    )

    wx, wy = pl.pallas_call(
        _csafm_kernel,
        out_shape=(
            jax.ShapeDtypeStruct((rows, HW_blk), dtype),
            jax.ShapeDtypeStruct((rows, HW_blk), Fy.dtype),
        ),
        grid_spec=pltpu.PrefetchScalarGridSpec(
            num_scalar_prefetch=0,
            grid=grid,
            in_specs=[blk, blk],
            out_specs=[blk, blk],
        ),
        compiler_params=pltpu.CompilerParams(
            dimension_semantics=("parallel",),
            vmem_limit_bytes=vmem_limit_bytes,
        ),
        cost_estimate=cost,
    )(x, y)

    if lane_pad:
        wx = wx[:, :HW]
        wy = wy[:, :HW]
    return wx.reshape(B, C, H, W), wy.reshape(B, C, H, W)


def _reference(Fx, Fy):
    """Pure-JAX reference mirroring the PyTorch module."""
    B, C, H, W = Fx.shape
    x = Fx.reshape(B, C, -1).astype(jnp.float32)
    y = Fy.reshape(B, C, -1).astype(jnp.float32)
    dot = jnp.sum(x * y, axis=2)
    nx = jnp.sqrt(jnp.sum(x * x, axis=2))
    ny = jnp.sqrt(jnp.sum(y * y, axis=2))
    cos = dot / jnp.maximum(nx * ny, _EPS)
    w = jnp.maximum(cos, 0.0)[:, :, None, None]
    return (w * Fx + Fx, (1.0 - w) * Fy + Fy)


if __name__ == "__main__":
    key = jax.random.PRNGKey(0)
    k1, k2, k3, k4, k5, k6 = jax.random.split(key, 6)

    # Main test: small NCHW shapes consistent with the module (no padding path).
    B, C, H, W = 2, 4, 16, 16
    Fx = jax.random.normal(k1, (B, C, H, W), dtype=jnp.float32)
    Fy = jax.random.normal(k2, (B, C, H, W), dtype=jnp.float32)
    wx, wy = csafm_forward(Fx, Fy)
    jax.block_until_ready((wx, wy))
    rx, ry = _reference(Fx, Fy)
    assert wx.shape == (B, C, H, W) and wy.shape == (B, C, H, W)
    assert jnp.allclose(wx, rx, atol=1e-5, rtol=1e-5)
    assert jnp.allclose(wy, ry, atol=1e-5, rtol=1e-5)

    # Ragged rows (partial last block, masked writeback) with HW >= 128.
    B2, C2, H2, W2 = 3, 7, 16, 16
    Gx = jax.random.normal(k3, (B2, C2, H2, W2), dtype=jnp.float32)
    Gy = jax.random.normal(k4, (B2, C2, H2, W2), dtype=jnp.float32)
    gwx, gwy = csafm_forward(Gx, Gy)
    jax.block_until_ready((gwx, gwy))
    grx, gry = _reference(Gx, Gy)
    assert jnp.allclose(gwx, grx, atol=1e-5, rtol=1e-5)
    assert jnp.allclose(gwy, gry, atol=1e-5, rtol=1e-5)

    # Degenerate HW < 128 (lane-pad path) plus non-multiple-of-8 row count.
    B3, C3, H3, W3 = 2, 3, 10, 7
    Hx = jax.random.normal(k5, (B3, C3, H3, W3), dtype=jnp.float32)
    Hy = jax.random.normal(k6, (B3, C3, H3, W3), dtype=jnp.float32)
    hwx, hwy = csafm_forward(Hx, Hy)
    jax.block_until_ready((hwx, hwy))
    hrx, hry = _reference(Hx, Hy)
    assert jnp.allclose(hwx, hrx, atol=1e-5, rtol=1e-5)
    assert jnp.allclose(hwy, hry, atol=1e-5, rtol=1e-5)

    # Zero-norm inputs: eps clamp must avoid NaN/Inf.
    zx, zy = csafm_forward(jnp.zeros((B, C, H, W), jnp.float32),
                           jnp.zeros((B, C, H, W), jnp.float32))
    jax.block_until_ready((zx, zy))
    assert bool(jnp.all(jnp.isfinite(zx))) and bool(jnp.all(jnp.isfinite(zy)))
    assert bool(jnp.all(zx == 0.0)) and bool(jnp.all(zy == 0.0))

    print("KERNEL_OK")
</pallas_src>

<mosaic_0001>
module attributes {stable_mosaic.version = 11 : i64} {
  func.func @_csafm_kernel(%arg0: i32, %arg1: memref<8x256xf32, #tpu.memory_space<vmem>>, %arg2: memref<8x256xf32, #tpu.memory_space<vmem>>, %arg3: memref<8x256xf32, #tpu.memory_space<vmem>>, %arg4: memref<8x256xf32, #tpu.memory_space<vmem>>) attributes {dimension_semantics = [#tpu.dimension_semantics<parallel>], iteration_bounds = array<i64: 1>, scalar_prefetch = 0 : i64, scratch_operands = 0 : i64, tpu.core_type = #tpu.core_type<tc>, window_params = [{transform_indices = @transform_0, window_bounds = array<i64: 8, 256>}, {transform_indices = @transform_1, window_bounds = array<i64: 8, 256>}, {transform_indices = @transform_2, window_bounds = array<i64: 8, 256>}, {transform_indices = @transform_3, window_bounds = array<i64: 8, 256>}]} {
    %c0 = arith.constant 0 : index
    %c0_0 = arith.constant 0 : index
    %0 = vector.load %arg1[%c0, %c0_0] : memref<8x256xf32, #tpu.memory_space<vmem>>, vector<8x256xf32>
    %c0_1 = arith.constant 0 : index
    %c0_2 = arith.constant 0 : index
    %1 = vector.load %arg2[%c0_1, %c0_2] : memref<8x256xf32, #tpu.memory_space<vmem>>, vector<8x256xf32>
    %2 = arith.mulf %0, %1 : vector<8x256xf32>
    %cst = arith.constant dense<0.000000e+00> : vector<8xf32>
    %3 = vector.multi_reduction <add>, %2, %cst [1] : vector<8x256xf32> to vector<8xf32>
    %4 = vector.shape_cast %3 : vector<8xf32> to vector<8x1xf32>
    %5 = arith.mulf %0, %0 : vector<8x256xf32>
    %cst_3 = arith.constant dense<0.000000e+00> : vector<8xf32>
    %6 = vector.multi_reduction <add>, %5, %cst_3 [1] : vector<8x256xf32> to vector<8xf32>
    %7 = vector.shape_cast %6 : vector<8xf32> to vector<8x1xf32>
    %8 = arith.mulf %1, %1 : vector<8x256xf32>
    %cst_4 = arith.constant dense<0.000000e+00> : vector<8xf32>
    %9 = vector.multi_reduction <add>, %8, %cst_4 [1] : vector<8x256xf32> to vector<8xf32>
    %10 = vector.shape_cast %9 : vector<8xf32> to vector<8x1xf32>
    %11 = arith.mulf %7, %10 : vector<8x1xf32>
    %cst_5 = arith.constant 1.000000e-16 : f32
    %12 = vector.broadcast %cst_5 : f32 to vector<8x1xf32>
    %13 = arith.maximumf %11, %12 : vector<8x1xf32>
    %14 = math.rsqrt %13 : vector<8x1xf32>
    %15 = arith.mulf %4, %14 : vector<8x1xf32>
    %cst_6 = arith.constant 0.000000e+00 : f32
    %16 = vector.broadcast %cst_6 : f32 to vector<8x1xf32>
    %17 = arith.maximumf %15, %16 : vector<8x1xf32>
    %cst_7 = arith.constant 1.000000e+00 : f32
    %18 = vector.broadcast %cst_7 : f32 to vector<8x1xf32>
    %19 = arith.addf %18, %17 : vector<8x1xf32>
    %20 = vector.broadcast %19 : vector<8x1xf32> to vector<8x256xf32>
    %21 = arith.mulf %0, %20 : vector<8x256xf32>
    %c0_8 = arith.constant 0 : index
    %c0_9 = arith.constant 0 : index
    %22 = vector.load %arg3[%c0_8, %c0_9] : memref<8x256xf32, #tpu.memory_space<vmem>>, vector<8x256xf32>
    tpu.vector_store %arg3[%c0_8, %c0_9], %21 {strides = array<i32>} : memref<8x256xf32, #tpu.memory_space<vmem>>, vector<8x256xf32>,
    %cst_10 = arith.constant 2.000000e+00 : f32
    %23 = vector.broadcast %cst_10 : f32 to vector<8x1xf32>
    %24 = arith.subf %23, %17 : vector<8x1xf32>
    %25 = vector.broadcast %24 : vector<8x1xf32> to vector<8x256xf32>
    %26 = arith.mulf %1, %25 : vector<8x256xf32>
    %c0_11 = arith.constant 0 : index
    %c0_12 = arith.constant 0 : index
    %27 = vector.load %arg4[%c0_11, %c0_12] : memref<8x256xf32, #tpu.memory_space<vmem>>, vector<8x256xf32>
    tpu.vector_store %arg4[%c0_11, %c0_12], %26 {strides = array<i32>} : memref<8x256xf32, #tpu.memory_space<vmem>>, vector<8x256xf32>,
    return
  }
  func.func @transform_0(%arg0: i32) -> (i32, i32) {
    %c0_i32 = arith.constant 0 : i32
    %c0_i32_0 = arith.constant 0 : i32
    return %arg0, %c0_i32 : i32, i32
  }
  func.func @transform_1(%arg0: i32) -> (i32, i32) {
    %c0_i32 = arith.constant 0 : i32
    %c0_i32_0 = arith.constant 0 : i32
    return %arg0, %c0_i32 : i32, i32
  }
  func.func @transform_2(%arg0: i32) -> (i32, i32) {
    %c0_i32 = arith.constant 0 : i32
    %c0_i32_0 = arith.constant 0 : i32
    return %arg0, %c0_i32 : i32, i32
  }
  func.func @transform_3(%arg0: i32) -> (i32, i32) {
    %c0_i32 = arith.constant 0 : i32
    %c0_i32_0 = arith.constant 0 : i32
    return %arg0, %c0_i32 : i32, i32
  }
}

</mosaic_0001>

<llo_original>
// kernel: tpu_custom_call.1
$region0: #{tpu_custom_call.1}
  #allocation0 [shape = 'u32[]', space=smem, size = 0x4, offset = 0x4, fixed_abs, tag = 'smem constant byte address 0x4 - core index']
  #allocation1 [shape = 'u32[144,128]{1,0:T(1,128)}', space=vmem, size = 0x12000, scoped, tag = 'internal scratch']
  %s0 = inlined_call_operand.hbm [shape: f32[8,256], index: 0, kind: input, shape index: {}]
  %s1 = inlined_call_operand.hbm [shape: f32[8,256], index: 1, kind: input, shape index: {}]
  %s2 = inlined_call_operand.hbm [shape: f32[8,256], index: 2, kind: output, shape index: {0}]
  %s3 = inlined_call_operand.hbm [shape: f32[8,256], index: 3, kind: output, shape index: {1}]
  %4 = xla_tuple %s2, %s3
  %s5 = sld [smem:[#allocation0]]
  $region34: #{tpu_custom_call.1} parent=0
    _
  %s7 = ssub.s32 1, %s5
  %s8 = scalar_select 0, %s7, %s5
  $region1: #{tpu_custom_call.1} parent=0
    #allocation2 [shape = 'u8[8192]{0}', space=vmem, size = 0x2000, scoped, tag = 'input window, operand 0, single buffered']
    #allocation3 [shape = 's32[1]{0}', space=sflag, size = 0x4, scoped, tag = 'scoped memory for tpu_custom_call.1']
    #allocation4 [shape = 's32[1]{0}', space=sflag, size = 0x4, scoped, tag = 'scoped memory for tpu_custom_call.1']
    #allocation5 [shape = 'u8[8192]{0}', space=vmem, size = 0x2000, scoped, tag = 'input window, operand 1, single buffered']
    #allocation6 [shape = 's32[1]{0}', space=sflag, size = 0x4, scoped, tag = 'scoped memory for tpu_custom_call.1']
    #allocation7 [shape = 'u8[8192]{0}', space=vmem, size = 0x2000, scoped, tag = 'output window, operand 0, single buffered']
    #allocation8 [shape = 'u8[8192]{0}', space=vmem, size = 0x2000, scoped, tag = 'output window, operand 1, single buffered']
    #allocation9 [shape = 's32[1]{0}', space=sflag, size = 0x4, scoped, tag = 'scoped memory for tpu_custom_call.1']
    %9 = vsyncpa [#allocation3], 0
    %10 = vsyncpa [#allocation6], 0
    %11 = vsyncpa [#allocation4], 0
    %12 = vsyncpa [#allocation9], 0
    // Predicated region
    $region2: #{tpu_custom_call.1} parent=1 // pred_check
      _
    $region3: #{tpu_custom_call.1} parent=1 // pred_check_branch
      %14 = sbr.rel (0) target = $region5
    $region4: #{tpu_custom_call.1} parent=1 // pred_region
      %s16 = ssub.s32 256, 256
      %17 = vsyncadd [#allocation3], %s16
      %s19 = sshll.u32 [#allocation2], 4
      %s20 = int_to_ptr.vmem [resolvable:$true] %s19
      %22 = dma.hbm_to_vmem [thread:$0]  %s0, 256, %s20, [#allocation3]
    $region5: #{tpu_custom_call.1} parent=1 // pred_fallthru
      _
    // Predicated region
    $region6: #{tpu_custom_call.1} parent=1 // pred_check
      _
    $region7: #{tpu_custom_call.1} parent=1 // pred_check_branch
      %24 = sbr.rel (0) target = $region9
    $region8: #{tpu_custom_call.1} parent=1 // pred_region
      %s26 = ssub.s32 256, 256
      %27 = vsyncadd [#allocation6], %s26
      %s29 = sshll.u32 [#allocation5], 4
      %s30 = int_to_ptr.vmem [resolvable:$true] %s29
      %32 = dma.hbm_to_vmem [thread:$0]  %s1, 256, %s30, [#allocation6]
    $region9: #{tpu_custom_call.1} parent=1 // pred_fallthru
      _
    // Predicated region
    $region10: #{tpu_custom_call.1} parent=1 // pred_check
      _
    $region11: #{tpu_custom_call.1} parent=1 // pred_check_branch
      %34 = sbr.rel (0) target = $region13
    $region12: #{tpu_custom_call.1} parent=1 // pred_region
      %35 = dma.done [#allocation3], 256
    $region13: #{tpu_custom_call.1} parent=1 // pred_fallthru
      _
    // Predicated region
    $region14: #{tpu_custom_call.1} parent=1 // pred_check
      _
    $region15: #{tpu_custom_call.1} parent=1 // pred_check_branch
      %37 = sbr.rel (0) target = $region17
    $region16: #{tpu_custom_call.1} parent=1 // pred_region
      %38 = dma.done [#allocation6], 256
    $region17: #{tpu_custom_call.1} parent=1 // pred_fallthru
      _
    %v39 = vld [vmem:[#allocation2] sm:$0xff]
    %v40 = vld [vmem:[#allocation2 + $0x8] sm:$0xff]
    %v41 = vld [vmem:[#allocation5] sm:$0xff]
    %v42 = vld [vmem:[#allocation5 + $0x8] sm:$0xff]
    %v43 = vmul.f32 %v39, %v41
    %v44 = vmul.f32 %v40, %v42
    %v45 = vadd.f32 %v43, %v44
    %46 = vadd.xlane.f32.xlu0 %v45
    %v47 = vpop.xlane.xlu0 %46
    %v48 = vmul.f32 %v39, %v39
    %v49 = vmul.f32 %v40, %v40
    %v50 = vadd.f32 %v48, %v49
    %51 = vadd.xlane.f32.xlu0 %v50
    %v52 = vpop.xlane.xlu0 %51
    %v53 = vmul.f32 %v41, %v41
    %v54 = vmul.f32 %v42, %v42
    %v55 = vadd.f32 %v53, %v54
    %56 = vadd.xlane.f32.xlu0 %v55
    %v57 = vpop.xlane.xlu0 %56
    %v58 = vmul.f32 %v52, %v57
    %v59 = vmax.f32 %v58, 1e-16
    %v60 = vrsqrt.pop %v59
    %v61 = vmul.f32 %v47, %v60
    %v62 = vmax.f32 %v61, 0.0
    %v63 = vadd.f32 %v62, 1.0
    %v64 = vmul.f32 %v39, %v63
    %v65 = vmul.f32 %v40, %v63
    %66 = vst [vmem:[#allocation7] sm:$0xff] %v64
    %67 = vst [vmem:[#allocation7 + $0x8] sm:$0xff] %v65
    %v68 = vsub.f32 2.0, %v62
    %v69 = vmul.f32 %v41, %v68
    %v70 = vmul.f32 %v42, %v68
    %71 = vst [vmem:[#allocation8] sm:$0xff] %v69
    %72 = vst [vmem:[#allocation8 + $0x8] sm:$0xff] %v70
    // Predicated region
    $region18: #{tpu_custom_call.1} parent=1 // pred_check
      _
    $region19: #{tpu_custom_call.1} parent=1 // pred_check_branch
      %74 = sbr.rel (0) target = $region21
    $region20: #{tpu_custom_call.1} parent=1 // pred_region
      %s76 = ssub.s32 256, 256
      %77 = vsyncadd [#allocation4], %s76
      %s79 = sshll.u32 [#allocation7], 4
      %s80 = int_to_ptr.vmem [resolvable:$true] %s79
      %82 = dma.vmem_to_hbm [thread:$0]  %s80, 256, %s2, [#allocation4]
    $region21: #{tpu_custom_call.1} parent=1 // pred_fallthru
      _
    // Predicated region
    $region22: #{tpu_custom_call.1} parent=1 // pred_check
      _
    $region23: #{tpu_custom_call.1} parent=1 // pred_check_branch
      %84 = sbr.rel (0) target = $region25
    $region24: #{tpu_custom_call.1} parent=1 // pred_region
      %s86 = ssub.s32 256, 256
      %87 = vsyncadd [#allocation9], %s86
      %s89 = sshll.u32 [#allocation8], 4
      %s90 = int_to_ptr.vmem [resolvable:$true] %s89
      %92 = dma.vmem_to_hbm [thread:$0]  %s90, 256, %s3, [#allocation9]
    $region25: #{tpu_custom_call.1} parent=1 // pred_fallthru
      _
    // Predicated region
    $region26: #{tpu_custom_call.1} parent=1 // pred_check
      _
    $region27: #{tpu_custom_call.1} parent=1 // pred_check_branch
      %94 = sbr.rel (0) target = $region29
    $region28: #{tpu_custom_call.1} parent=1 // pred_region
      %95 = dma.done [#allocation4], 256
    $region29: #{tpu_custom_call.1} parent=1 // pred_fallthru
      _
    // Predicated region
    $region30: #{tpu_custom_call.1} parent=1 // pred_check
      _
    $region31: #{tpu_custom_call.1} parent=1 // pred_check_branch
      %97 = sbr.rel (0) target = $region33
    $region32: #{tpu_custom_call.1} parent=1 // pred_region
      %98 = dma.done [#allocation9], 256
    $region33: #{tpu_custom_call.1} parent=1 // pred_fallthru
      _
    %99 = vsyncpa [#allocation3], 1
    %100 = vsyncpa [#allocation6], 1
    %101 = vsyncpa [#allocation4], 1
    %102 = vsyncpa [#allocation9], 1

</llo_original>
